<compile_context>
chip_gen: v6e
topology: v6e:2x2x1
jax: 0.10.0
libtpu: 0.0.40
codegen_flags: <defaults>
</compile_context>

<pallas_src>
import functools

import jax
import jax.numpy as jnp
from jax.experimental import pallas as pl
from jax.experimental.pallas import tpu as pltpu

_VMEM_LIMIT = 48 * 1024 * 1024  # above 16/32 MiB scoped defaults, below v7x's 64 MiB physical
_HIGHEST = jax.lax.Precision.HIGHEST


def _round_up(x, m):
    return pl.cdiv(x, m) * m


# --------------------------------------------------------------------------
# Fused per-side kernel (input layout (C, K, tile_n, D)):
#   GTConv:  z[k,n,d] = sum_c A[c,k,n,d] * softmax_c(W[c,k,n,d])
#   OneGraphAttention (per node n over its K slabs):
#     h      = tanh(z @ W1 + b1)
#     logit  = h @ W2 + b2                 (VPU multiply + lane reduce, width-1 output)
#     beta   = softmax_k(logit)            (elementwise across the K slabs, per-node max)
#     x[n,:] = sum_k beta * z
# --------------------------------------------------------------------------
def fused_side_kernel(a_ref, w_ref, w1_ref, b1_ref, w2t_ref, b2_ref, o_ref):
    C, K, TN, D = a_ref.shape

    # ---- GTConv: softmax over the channel axis, weighted sum over channels ----
    if C == 2:
        # softmax over 2 channels == sigmoid(w0 - w1): one exp per element.
        w0, w1 = w_ref[0], w_ref[1]
        a0, a1 = a_ref[0], a_ref[1]
        s0 = pl.reciprocal(1.0 + jnp.exp(w1 - w0), approx=True)      # weight of channel 0
        z = a1 + (a0 - a1) * s0                                       # (K, TN, D)
    else:
        w = w_ref[...]
        a = a_ref[...]
        wmax = jnp.max(w, axis=0, keepdims=True)
        e = jnp.exp(w - wmax)
        sm = e * pl.reciprocal(jnp.sum(e, axis=0, keepdims=True), approx=True)
        z = jnp.sum(a * sm, axis=0)                                   # (K, TN, D)

    # ---- attention projection, batched over all K*TN rows (single MXU matmul) ----
    z2 = z.reshape(K * TN, D)          # merge of leading dims; TN % 8 == 0 -> layout no-op
    h = jnp.tanh(
        jnp.dot(z2, w1_ref[...], preferred_element_type=jnp.float32,
                precision=_HIGHEST) + b1_ref[...]
    )                                                                 # (K*TN, H)
    # Second projection has output width 1 -> VPU multiply + lane reduce.
    logits = jnp.sum(h * w2t_ref[...], axis=-1, keepdims=True) + b2_ref[0, 0]  # (K*TN, 1)
    logits = logits.reshape(K, TN, 1)

    # ---- per-node softmax over K: pure elementwise work across the K slabs ----
    m = jnp.max(logits, axis=0, keepdims=True)        # per-node max  (1, TN, 1)
    e = jnp.exp(logits - m)                           # (K, TN, 1), max term == 1
    den = jnp.sum(e, axis=0)                          # (TN, 1), always >= 1
    num = jnp.sum(e * z, axis=0)                      # (TN, D)
    o_ref[...] = num * pl.reciprocal(den, approx=True)


def _pick_tile_n(N, target=512):
    """Largest multiple-of-8 divisor of N that is <= target, preferring >=2 grid steps
    (so v7x's two TensorCores both get work)."""
    divs = [t for t in range(1, N + 1) if N % t == 0 and t % 8 == 0]
    if not divs:
        return N                                    # tiny / odd N: single full-array block
    multi = [t for t in divs if t <= target and N // t >= 2]
    if multi:
        return max(multi)
    small = [t for t in divs if t <= target]
    return max(small) if small else min(divs)


def gtconv_oga_fused(A, W, W1, b1, W2, b2, *, tile_n=None):
    """A: (C,N,K,D); W: (1,C,N,K,D); W1:(D,H); b1:(1,H); W2:(H,1); b2:(1,1) -> (N,D)."""
    C, N, K, D = A.shape
    H = W1.shape[1]
    if tile_n is None:
        tile_n = _pick_tile_n(N)
    # BlockSpec (8,128) rule + no ragged node tiles. Production N should be a multiple of 8.
    assert N % tile_n == 0 and (tile_n % 8 == 0 or tile_n == N)

    # Layout: item axis K ahead of the node axis so each k-slab of a node tile is a
    # (tile_n, D) slab -> per-node reductions over K are elementwise across slabs.
    A2 = jnp.transpose(A, (0, 2, 1, 3))              # (C, K, N, D)
    Wc = jnp.transpose(W[0], (0, 2, 1, 3))           # (C, K, N, D)
    w2t = jnp.transpose(W2)                          # (1, H): lane-dense row for VPU reduce

    return pl.pallas_call(
        fused_side_kernel,
        out_shape=jax.ShapeDtypeStruct((N, D), jnp.float32),
        grid=(N // tile_n,),
        in_specs=[
            pl.BlockSpec((C, K, tile_n, D), lambda i: (0, 0, i, 0)),
            pl.BlockSpec((C, K, tile_n, D), lambda i: (0, 0, i, 0)),
            pl.BlockSpec((D, H), lambda i: (0, 0)),      # constant index map -> fetched once
            pl.BlockSpec((1, H), lambda i: (0, 0)),
            pl.BlockSpec((1, H), lambda i: (0, 0)),
            pl.BlockSpec(memory_space=pltpu.MemorySpace.SMEM),   # scalar bias b2
        ],
        out_specs=pl.BlockSpec((tile_n, D), lambda i: (i, 0)),
        compiler_params=pltpu.CompilerParams(
            dimension_semantics=("parallel",),
            vmem_limit_bytes=_VMEM_LIMIT),
    )(A2, Wc, W1, b1, w2t, b2)


# --------------------------------------------------------------------------
# score = x_u @ x_v.T
#   * D <= tk (one k-step, the production case): direct write, no scratch, no pl.when.
#   * otherwise: standard f32 VMEM accumulator over the k grid axis.
# --------------------------------------------------------------------------
def score_kernel_direct(xu_ref, xv_ref, o_ref):
    o_ref[...] = jax.lax.dot_general(
        xu_ref[...], xv_ref[...],
        dimension_numbers=(((1,), (1,)), ((), ())),
        preferred_element_type=jnp.float32,
        precision=_HIGHEST,
    ).astype(o_ref.dtype)


def score_kernel_acc(xu_ref, xv_ref, o_ref, acc_ref):
    @pl.when(pl.program_id(2) == 0)
    def _():
        acc_ref[...] = jnp.zeros_like(acc_ref)

    acc_ref[...] += jax.lax.dot_general(
        xu_ref[...], xv_ref[...],
        dimension_numbers=(((1,), (1,)), ((), ())),
        preferred_element_type=jnp.float32,
        precision=_HIGHEST,
    )

    @pl.when(pl.program_id(2) == pl.num_programs(2) - 1)
    def _():
        o_ref[...] = acc_ref[...].astype(o_ref.dtype)


def score_matmul(x_u, x_v, *, tm=256, tn=256, tk=512):
    Nu, D = x_u.shape
    Nb, Dv = x_v.shape
    assert D == Dv
    tm, tn, tk = min(tm, Nu), min(tn, Nb), min(tk, D)
    # Zero-pad to tile multiples: no unspecified ragged-block contributions, then slice.
    Mp, Np, Kp = _round_up(Nu, tm), _round_up(Nb, tn), _round_up(D, tk)
    xu = jnp.pad(x_u, ((0, Mp - Nu), (0, Kp - D))) if (Mp, Kp) != (Nu, D) else x_u
    xv = jnp.pad(x_v, ((0, Np - Nb), (0, Kp - D))) if (Np, Kp) != (Nb, D) else x_v

    if Kp // tk == 1:
        out = pl.pallas_call(
            score_kernel_direct,
            out_shape=jax.ShapeDtypeStruct((Mp, Np), jnp.float32),
            grid=(Mp // tm, Np // tn),
            in_specs=[
                pl.BlockSpec((tm, tk), lambda i, j: (i, 0)),
                pl.BlockSpec((tn, tk), lambda i, j: (j, 0)),
            ],
            out_specs=pl.BlockSpec((tm, tn), lambda i, j: (i, j)),
            compiler_params=pltpu.CompilerParams(
                dimension_semantics=("parallel", "parallel"),
                vmem_limit_bytes=_VMEM_LIMIT),
        )(xu, xv)
    else:
        out = pl.pallas_call(
            score_kernel_acc,
            out_shape=jax.ShapeDtypeStruct((Mp, Np), jnp.float32),
            grid=(Mp // tm, Np // tn, Kp // tk),
            in_specs=[
                pl.BlockSpec((tm, tk), lambda i, j, k: (i, k)),
                pl.BlockSpec((tn, tk), lambda i, j, k: (j, k)),
            ],
            out_specs=pl.BlockSpec((tm, tn), lambda i, j, k: (i, j)),
            scratch_shapes=[pltpu.VMEM((tm, tn), jnp.float32)],
            compiler_params=pltpu.CompilerParams(
                dimension_semantics=("parallel", "parallel", "arbitrary"),
                vmem_limit_bytes=_VMEM_LIMIT),
        )(xu, xv)

    if (Mp, Np) != (Nu, Nb):
        out = out[:Nu, :Nb]
    return out


# --------------------------------------------------------------------------
# NN.forward (kernelizable hot path): fused GTConv+OneGraphAttention per side -> score.
# --------------------------------------------------------------------------
def nn_forward(user_event_embed, event_user_embed,
               w_conv_user, w_conv_event, oga_user_params, oga_event_params,
               *, tile_n_user=None, tile_n_event=None):
    x_u = gtconv_oga_fused(user_event_embed, w_conv_user, *oga_user_params,
                           tile_n=tile_n_user)                       # (Nu, D)
    x_v = gtconv_oga_fused(event_user_embed, w_conv_event, *oga_event_params,
                           tile_n=tile_n_event)                      # (Nb, D)
    # TODO(synk): GRU, nn.Embedding lookups / compute_embedding dict loops, and
    # torch_geometric GATConv/GCNConv + dropout have no clean Pallas equivalent here;
    # x_u / x_v are the fused attention embeddings fed straight into the score matmul.
    score = score_matmul(x_u, x_v)                                   # (Nu, Nb)
    return score, x_u, x_v


# --------------------------------------------------------------------------
# Pure-JAX reference (for correctness check).
# --------------------------------------------------------------------------
def ref_forward(user_event_embed, event_user_embed,
                w_conv_user, w_conv_event, oga_user_params, oga_event_params):
    def gtconv_ref(A, W):
        sm = jax.nn.softmax(W, axis=1)               # (1, C, N, K, D)
        return jnp.sum((A[None] * sm)[0], axis=0)    # (N, K, D)

    def oga_ref(z, W1, b1, W2, b2):
        def single(zn):
            h = jnp.tanh(zn @ W1 + b1[0])
            w = h @ W2 + b2[0]
            beta = jax.nn.softmax(w, axis=0)
            return jnp.sum(beta * zn, axis=0)
        return jax.vmap(single)(z)

    ue = gtconv_ref(user_event_embed, w_conv_user)
    ev = gtconv_ref(event_user_embed, w_conv_event)
    x_u = oga_ref(ue, *oga_user_params)
    x_v = oga_ref(ev, *oga_event_params)
    return x_u @ x_v.T, x_u, x_v


if __name__ == "__main__":
    # in_channels, num_user, num_business, items-per-node, num_embed, attention hidden
    C, Nu, Nb, K, D, H = 2, 16, 16, 5, 32, 32

    key = jax.random.PRNGKey(0)
    ks = jax.random.split(key, 4)

    # "A" inputs to the two GTConvs (concatenated embedding tensors, out_channels dim squeezed)
    user_event_embed = jax.random.normal(ks[0], (C, Nu, K, D), jnp.float32)
    event_user_embed = jax.random.normal(ks[1], (C, Nb, K, D), jnp.float32)

    # GTConv weights: constant 0.1 as in reset_parameters()
    w_conv_user = jnp.full((1, C, Nu, K, D), 0.1, jnp.float32)
    w_conv_event = jnp.full((1, C, Nb, K, D), 0.1, jnp.float32)

    # OneGraphAttention parameters (deterministic synthetic init)
    def make_oga(k):
        ka, kb, kc, kd = jax.random.split(k, 4)
        W1 = jax.random.normal(ka, (D, H), jnp.float32) * 0.1
        b1 = jax.random.normal(kb, (1, H), jnp.float32) * 0.1
        W2 = jax.random.normal(kc, (H, 1), jnp.float32) * 0.1
        b2 = jax.random.normal(kd, (1, 1), jnp.float32) * 0.1
        return (W1, b1, W2, b2)

    oga_user_params = make_oga(ks[2])
    oga_event_params = make_oga(ks[3])

    # Defaults pick tile_n=8 here (2 parallel grid steps per side -> both v7x TCs busy);
    # at production N they pick tiles up to 512 nodes per step.
    score, x_u, x_v = nn_forward(user_event_embed, event_user_embed,
                                 w_conv_user, w_conv_event,
                                 oga_user_params, oga_event_params)
    jax.block_until_ready(score)

    score_ref, xu_ref, xv_ref = ref_forward(user_event_embed, event_user_embed,
                                            w_conv_user, w_conv_event,
                                            oga_user_params, oga_event_params)
    assert jnp.allclose(x_u, xu_ref, atol=1e-2, rtol=1e-2)
    assert jnp.allclose(x_v, xv_ref, atol=1e-2, rtol=1e-2)
    assert jnp.allclose(score, score_ref, atol=1e-2, rtol=1e-2)

    print("KERNEL_OK")
</pallas_src>

<mosaic_0001>
module attributes {stable_mosaic.version = 11 : i64} {
  func.func @fused_side_kernel(%arg0: i32, %arg1: memref<2x5x8x32xf32, #tpu.memory_space<vmem>>, %arg2: memref<2x5x8x32xf32, #tpu.memory_space<vmem>>, %arg3: memref<32x32xf32, #tpu.memory_space<vmem>>, %arg4: memref<1x32xf32, #tpu.memory_space<vmem>>, %arg5: memref<1x32xf32, #tpu.memory_space<vmem>>, %arg6: memref<1x1xf32, #tpu.memory_space<smem>>, %arg7: memref<8x32xf32, #tpu.memory_space<vmem>>) attributes {dimension_semantics = [#tpu.dimension_semantics<parallel>], iteration_bounds = array<i64: 2>, scalar_prefetch = 0 : i64, scratch_operands = 0 : i64, tpu.core_type = #tpu.core_type<tc>, window_params = [{transform_indices = @transform_0, window_bounds = array<i64: 2, 5, 8, 32>}, {transform_indices = @transform_1, window_bounds = array<i64: 2, 5, 8, 32>}, {pipeline_mode = #tpu.pipeline_mode<synchronous>, transform_indices = @transform_2, window_bounds = array<i64: 32, 32>}, {pipeline_mode = #tpu.pipeline_mode<synchronous>, transform_indices = @transform_3, window_bounds = array<i64: 1, 32>}, {pipeline_mode = #tpu.pipeline_mode<synchronous>, transform_indices = @transform_4, window_bounds = array<i64: 1, 32>}, {transform_indices = @transform_5, window_bounds = array<i64: 1, 1>}, {transform_indices = @transform_6, window_bounds = array<i64: 8, 32>}]} {
    %c0 = arith.constant 0 : index
    %c0_0 = arith.constant 0 : index
    %c0_1 = arith.constant 0 : index
    %c0_2 = arith.constant 0 : index
    %0 = vector.load %arg2[%c0, %c0_0, %c0_1, %c0_2] : memref<2x5x8x32xf32, #tpu.memory_space<vmem>>, vector<1x5x8x32xf32>
    %1 = vector.shape_cast %0 : vector<1x5x8x32xf32> to vector<5x8x32xf32>
    %c1 = arith.constant 1 : index
    %c0_3 = arith.constant 0 : index
    %c0_4 = arith.constant 0 : index
    %c0_5 = arith.constant 0 : index
    %2 = vector.load %arg2[%c1, %c0_3, %c0_4, %c0_5] : memref<2x5x8x32xf32, #tpu.memory_space<vmem>>, vector<1x5x8x32xf32>
    %3 = vector.shape_cast %2 : vector<1x5x8x32xf32> to vector<5x8x32xf32>
    %c0_6 = arith.constant 0 : index
    %c0_7 = arith.constant 0 : index
    %c0_8 = arith.constant 0 : index
    %c0_9 = arith.constant 0 : index
    %4 = vector.load %arg1[%c0_6, %c0_7, %c0_8, %c0_9] : memref<2x5x8x32xf32, #tpu.memory_space<vmem>>, vector<1x5x8x32xf32>
    %5 = vector.shape_cast %4 : vector<1x5x8x32xf32> to vector<5x8x32xf32>
    %c1_10 = arith.constant 1 : index
    %c0_11 = arith.constant 0 : index
    %c0_12 = arith.constant 0 : index
    %c0_13 = arith.constant 0 : index
    %6 = vector.load %arg1[%c1_10, %c0_11, %c0_12, %c0_13] : memref<2x5x8x32xf32, #tpu.memory_space<vmem>>, vector<1x5x8x32xf32>
    %7 = vector.shape_cast %6 : vector<1x5x8x32xf32> to vector<5x8x32xf32>
    %8 = arith.subf %3, %1 : vector<5x8x32xf32>
    %9 = math.exp %8 : vector<5x8x32xf32>
    %cst = arith.constant 1.000000e+00 : f32
    %10 = vector.broadcast %cst : f32 to vector<5x8x32xf32>
    %11 = arith.addf %10, %9 : vector<5x8x32xf32>
    %12 = tpu.reciprocal %11 {approx = true} : vector<5x8x32xf32> -> vector<5x8x32xf32>
    %13 = arith.subf %5, %7 : vector<5x8x32xf32>
    %14 = arith.mulf %13, %12 : vector<5x8x32xf32>
    %15 = arith.addf %7, %14 : vector<5x8x32xf32>
    %16 = vector.shape_cast %15 : vector<5x8x32xf32> to vector<40x32xf32>
    %c0_14 = arith.constant 0 : index
    %c0_15 = arith.constant 0 : index
    %17 = vector.load %arg3[%c0_14, %c0_15] : memref<32x32xf32, #tpu.memory_space<vmem>>, vector<32x32xf32>
    %cst_16 = arith.constant dense<0.000000e+00> : vector<40x32xf32>
    %18 = tpu.matmul %16, %17, %cst_16 {dimension_numbers = #tpu.dot_dimension_numbers<[1], [0], [0], [1], [0, 0, 1, 1], [], []>, precision = #tpu.contract_precision<fp32>} : vector<40x32xf32>, vector<32x32xf32>, vector<40x32xf32> -> vector<40x32xf32>
    %c0_17 = arith.constant 0 : index
    %c0_18 = arith.constant 0 : index
    %19 = vector.load %arg4[%c0_17, %c0_18] : memref<1x32xf32, #tpu.memory_space<vmem>>, vector<1x32xf32>
    %20 = vector.broadcast %19 : vector<1x32xf32> to vector<40x32xf32>
    %21 = arith.addf %18, %20 : vector<40x32xf32>
    %22 = math.tanh %21 : vector<40x32xf32>
    %c0_19 = arith.constant 0 : index
    %c0_20 = arith.constant 0 : index
    %23 = vector.load %arg5[%c0_19, %c0_20] : memref<1x32xf32, #tpu.memory_space<vmem>>, vector<1x32xf32>
    %24 = vector.broadcast %23 : vector<1x32xf32> to vector<40x32xf32>
    %25 = arith.mulf %22, %24 : vector<40x32xf32>
    %cst_21 = arith.constant dense<0.000000e+00> : vector<40xf32>
    %26 = vector.multi_reduction <add>, %25, %cst_21 [1] : vector<40x32xf32> to vector<40xf32>
    %27 = vector.shape_cast %26 : vector<40xf32> to vector<40x1xf32>
    %c0_22 = arith.constant 0 : index
    %c0_23 = arith.constant 0 : index
    %28 = memref.load %arg6[%c0_22, %c0_23] : memref<1x1xf32, #tpu.memory_space<smem>>
    %29 = vector.broadcast %28 : f32 to vector<40x1xf32>
    %30 = arith.addf %27, %29 : vector<40x1xf32>
    %31 = vector.shape_cast %30 : vector<40x1xf32> to vector<5x8x1xf32>
    %cst_24 = arith.constant dense<0xFF800000> : vector<8x1xf32>
    %32 = vector.multi_reduction <maximumf>, %31, %cst_24 [0] : vector<5x8x1xf32> to vector<8x1xf32>
    %33 = vector.shape_cast %32 : vector<8x1xf32> to vector<1x8x1xf32>
    %34 = vector.broadcast %33 : vector<1x8x1xf32> to vector<5x8x1xf32>
    %35 = arith.subf %31, %34 : vector<5x8x1xf32>
    %36 = math.exp %35 : vector<5x8x1xf32>
    %cst_25 = arith.constant dense<0.000000e+00> : vector<8x1xf32>
    %37 = vector.multi_reduction <add>, %36, %cst_25 [0] : vector<5x8x1xf32> to vector<8x1xf32>
    %38 = vector.broadcast %36 : vector<5x8x1xf32> to vector<5x8x32xf32>
    %39 = arith.mulf %38, %15 : vector<5x8x32xf32>
    %cst_26 = arith.constant dense<0.000000e+00> : vector<8x32xf32>
    %40 = vector.multi_reduction <add>, %39, %cst_26 [0] : vector<5x8x32xf32> to vector<8x32xf32>
    %41 = tpu.reciprocal %37 {approx = true} : vector<8x1xf32> -> vector<8x1xf32>
    %42 = vector.broadcast %41 : vector<8x1xf32> to vector<8x32xf32>
    %43 = arith.mulf %40, %42 : vector<8x32xf32>
    %c0_27 = arith.constant 0 : index
    %c0_28 = arith.constant 0 : index
    %44 = vector.load %arg7[%c0_27, %c0_28] : memref<8x32xf32, #tpu.memory_space<vmem>>, vector<8x32xf32>
    tpu.vector_store %arg7[%c0_27, %c0_28], %43 {strides = array<i32>} : memref<8x32xf32, #tpu.memory_space<vmem>>, vector<8x32xf32>,
    return
  }
  func.func @transform_0(%arg0: i32) -> (i32, i32, i32, i32) {
    %c0_i32 = arith.constant 0 : i32
    %c0_i32_0 = arith.constant 0 : i32
    %c0_i32_1 = arith.constant 0 : i32
    %c0_i32_2 = arith.constant 0 : i32
    return %c0_i32, %c0_i32_0, %arg0, %c0_i32_1 : i32, i32, i32, i32
  }
  func.func @transform_1(%arg0: i32) -> (i32, i32, i32, i32) {
    %c0_i32 = arith.constant 0 : i32
    %c0_i32_0 = arith.constant 0 : i32
    %c0_i32_1 = arith.constant 0 : i32
    %c0_i32_2 = arith.constant 0 : i32
    return %c0_i32, %c0_i32_0, %arg0, %c0_i32_1 : i32, i32, i32, i32
  }
  func.func @transform_2(%arg0: i32) -> (i32, i32) {
    %c0_i32 = arith.constant 0 : i32
    %c0_i32_0 = arith.constant 0 : i32
    %c0_i32_1 = arith.constant 0 : i32
    return %c0_i32, %c0_i32_0 : i32, i32
  }
  func.func @transform_3(%arg0: i32) -> (i32, i32) {
    %c0_i32 = arith.constant 0 : i32
    %c0_i32_0 = arith.constant 0 : i32
    %c0_i32_1 = arith.constant 0 : i32
    return %c0_i32, %c0_i32_0 : i32, i32
  }
  func.func @transform_4(%arg0: i32) -> (i32, i32) {
    %c0_i32 = arith.constant 0 : i32
    %c0_i32_0 = arith.constant 0 : i32
    %c0_i32_1 = arith.constant 0 : i32
    return %c0_i32, %c0_i32_0 : i32, i32
  }
  func.func @transform_5(%arg0: i32) -> (i32, i32) {
    %c0_i32 = arith.constant 0 : i32
    %c0_i32_0 = arith.constant 0 : i32
    %c0_i32_1 = arith.constant 0 : i32
    return %c0_i32, %c0_i32_0 : i32, i32
  }
  func.func @transform_6(%arg0: i32) -> (i32, i32) {
    %c0_i32 = arith.constant 0 : i32
    %c0_i32_0 = arith.constant 0 : i32
    return %arg0, %c0_i32 : i32, i32
  }
}

</mosaic_0001>

<llo_original>
// kernel: tpu_custom_call.1
$region0: #{tpu_custom_call.1}
  #allocation0 [shape = 'u32[]', space=smem, size = 0x4, offset = 0x4, fixed_abs, tag = 'smem constant byte address 0x4 - core index']
  #allocation1 [shape = 'u32[144,128]{1,0:T(1,128)}', space=vmem, size = 0x12000, scoped, tag = 'internal scratch']
  #allocation2 [shape = 'f32[1,1]{1,0:T(1,128)S(6)}', space=smem, size = 0x200, scoped, tag = 'scoped memory for tpu_custom_call.1']
  %s0 = inlined_call_operand.hbm [shape: f32[2,5,16,32], index: 0, kind: input, shape index: {}]
  %s1 = inlined_call_operand.hbm [shape: f32[2,5,16,32], index: 1, kind: input, shape index: {}]
  %s2 = inlined_call_operand.hbm [shape: f32[32,32], index: 2, kind: input, shape index: {}]
  %s3 = inlined_call_operand.vmem [shape: f32[1,32], index: 3, kind: input, shape index: {}]
  %s4 = inlined_call_operand.vmem [shape: f32[1,32], index: 4, kind: input, shape index: {}]
  %s5 = inlined_call_operand.<no memory space> [shape: f32[1,1], index: 5, kind: input, shape index: {}]
  %s6 = inlined_call_operand.hbm [shape: f32[16,32], index: 6, kind: output, shape index: {}]
  %s7 = sld [smem:[#allocation0]]
  $region69: #{tpu_custom_call.1} parent=0
    _
  %s9 = ssub.s32 1, %s7
  %s10 = scalar_select 0, %s9, %s7
  %11 = sst [smem:[#allocation2]] %s5
  $region1: #{tpu_custom_call.1} parent=0
    #allocation3 [shape = 'u8[81920]{0}', space=vmem, size = 0x14000, scoped, tag = 'input window, operand 0']
    #allocation4 [shape = 's32[2]{0}', space=sflag, size = 0x8, scoped, tag = 'scoped memory for tpu_custom_call.1']
    #allocation5 [shape = 's32[2]{0}', space=sflag, size = 0x8, scoped, tag = 'scoped memory for tpu_custom_call.1']
    #allocation6 [shape = 'u8[81920]{0}', space=vmem, size = 0x14000, scoped, tag = 'input window, operand 1']
    #allocation7 [shape = 's32[2]{0}', space=sflag, size = 0x8, scoped, tag = 'scoped memory for tpu_custom_call.1']
    #allocation8 [shape = 'u8[16384]{0}', space=vmem, size = 0x4000, scoped, tag = 'input window, operand 2, single buffered']
    #allocation9 [shape = 'u8[8192]{0}', space=vmem, size = 0x2000, scoped, tag = 'output window, operand 0']
    %12 = vsyncpa [#allocation4], 0
    %s13 = scalar_lea.sflag [#allocation4], 1
    %14 = vsyncpa %s13, 0
    %15 = vsyncpa [#allocation7], 0
    %s16 = scalar_lea.sflag [#allocation7], 1
    %17 = vsyncpa %s16, 0
    %18 = vsyncpa [#allocation5], 0
    %s19 = scalar_lea.sflag [#allocation5], 1
    %20 = vsyncpa %s19, 0
    loop: start=0, step=1, limit=4
    $region2: #{tpu_custom_call.1} parent=1 // loop_pre_header
      _
    $region3: #{tpu_custom_call.1} parent=1 // loop_header
      %s22 = sphi 0, %s26
      %p23 = scmp.ge.s32.totalorder %s22, 4
      %s32 = sphi 0, %s34
      %s35 = sphi 0, %s32
      %s36 = sphi 0, %s35
      %s52 = sphi 0, %s36
      %s58 = sphi 0, %s60
      %s61 = sphi 0, %s58
      %s62 = sphi 0, %s61
      %s78 = sphi 0, %s62
      %s82 = sphi 0, %s82
      %s84 = sphi 0, %s82
      %s85 = sphi 0, %s84
      %s99 = sphi 0, %s85
      %s103 = sphi 0, %s103
      %s105 = sphi 0, %s103
      %s106 = sphi 0, %s105
      %s120 = sphi 0, %s106
      %s124 = sphi 0, %s124
      %s126 = sphi 0, %s124
      %s127 = sphi 0, %s126
      %s141 = sphi 0, %s127
      %s145 = sphi 0, %s145
      %s147 = sphi 0, %s145
      %s148 = sphi 0, %s147
      %s162 = sphi 0, %s148
      %s168 = sphi 0, %s170
      %s171 = sphi 0, %s168
      %s172 = sphi 0, %s171
      %s188 = sphi 0, %s172
    $region4: #{tpu_custom_call.1} parent=1 // loop_header_branch
      %25 = sbr.rel (%p23) target = $region8
    $region5: #{tpu_custom_call.1} parent=1 // loop_body
      %s27 = ssub.s32 %s22, 1
      %s28 = ssub.s32 %s22, 2
      %s29 = sadd.s32 %s22, 1
      %s30 = ssub.s32 %s22, %s29
      %p31 = scmp.eq.s32.totalorder %s30, 0
      %s33 = sadd.s32 %s32, 1
      %s34 = scalar_select %p31, %s32, %s33
      %p37 = pneg %p31
      %p38 = scmp.eq.s32.totalorder %s22, 1
      %p39 = por %p37, %p38
      %p40 = scmp.ne.s32.totalorder %s32, %s35
      %p41 = scmp.eq.s32.totalorder %s22, 0
      %p42 = por %p40, %p41
      %p43 = scmp.ne.s32.totalorder %s32, %s35
      %p44 = scmp.eq.s32.totalorder %s27, 1
      %p45 = por %p43, %p44
      %p46 = scmp.ne.s32.totalorder %s35, %s36
      %p47 = scmp.eq.s32.totalorder %s27, 0
      %p48 = por %p46, %p47
      %p49 = scmp.ne.s32.totalorder %s35, %s36
      %p50 = scmp.eq.s32.totalorder %s28, 1
      %p51 = por %p49, %p50
      %p53 = scmp.ne.s32.totalorder %s36, %s52
      %p54 = scmp.eq.s32.totalorder %s28, 0
      %p55 = por %p53, %p54
      %s56 = ssub.s32 %s22, %s29
      %p57 = scmp.eq.s32.totalorder %s56, 0
      %s59 = sadd.s32 %s58, 1
      %s60 = scalar_select %p57, %s58, %s59
      %p63 = pneg %p57
      %p64 = scmp.eq.s32.totalorder %s22, 1
      %p65 = por %p63, %p64
      %p66 = scmp.ne.s32.totalorder %s58, %s61
      %p67 = scmp.eq.s32.totalorder %s22, 0
      %p68 = por %p66, %p67
      %p69 = scmp.ne.s32.totalorder %s58, %s61
      %p70 = scmp.eq.s32.totalorder %s27, 1
      %p71 = por %p69, %p70
      %p72 = scmp.ne.s32.totalorder %s61, %s62
      %p73 = scmp.eq.s32.totalorder %s27, 0
      %p74 = por %p72, %p73
      %p75 = scmp.ne.s32.totalorder %s61, %s62
      %p76 = scmp.eq.s32.totalorder %s28, 1
      %p77 = por %p75, %p76
      %p79 = scmp.ne.s32.totalorder %s62, %s78
      %p80 = scmp.eq.s32.totalorder %s28, 0
      %p81 = por %p79, %p80
      %s83 = sadd.s32 %s82, 1
      %p86 = scmp.eq.s32.totalorder %s22, 1
      %p87 = scmp.ne.s32.totalorder %s82, %s84
      %p88 = scmp.eq.s32.totalorder %s22, 0
      %p89 = por %p87, %p88
      %p90 = scmp.ne.s32.totalorder %s82, %s84
      %p91 = scmp.eq.s32.totalorder %s27, 1
      %p92 = por %p90, %p91
      %p93 = scmp.ne.s32.totalorder %s84, %s85
      %p94 = scmp.eq.s32.totalorder %s27, 0
      %p95 = por %p93, %p94
      %p96 = scmp.ne.s32.totalorder %s84, %s85
      %p97 = scmp.eq.s32.totalorder %s28, 1
      %p98 = por %p96, %p97
      %p100 = scmp.ne.s32.totalorder %s85, %s99
      %p101 = scmp.eq.s32.totalorder %s28, 0
      %p102 = por %p100, %p101
      %s104 = sadd.s32 %s103, 1
      %p107 = scmp.eq.s32.totalorder %s22, 1
      %p108 = scmp.ne.s32.totalorder %s103, %s105
      %p109 = scmp.eq.s32.totalorder %s22, 0
      %p110 = por %p108, %p109
      %p111 = scmp.ne.s32.totalorder %s103, %s105
      %p112 = scmp.eq.s32.totalorder %s27, 1
      %p113 = por %p111, %p112
      %p114 = scmp.ne.s32.totalorder %s105, %s106
      %p115 = scmp.eq.s32.totalorder %s27, 0
      %p116 = por %p114, %p115
      %p117 = scmp.ne.s32.totalorder %s105, %s106
      %p118 = scmp.eq.s32.totalorder %s28, 1
      %p119 = por %p117, %p118
      %p121 = scmp.ne.s32.totalorder %s106, %s120
      %p122 = scmp.eq.s32.totalorder %s28, 0
      %p123 = por %p121, %p122
      %s125 = sadd.s32 %s124, 1
      %p128 = scmp.eq.s32.totalorder %s22, 1
      %p129 = scmp.ne.s32.totalorder %s124, %s126
      %p130 = scmp.eq.s32.totalorder %s22, 0
      %p131 = por %p129, %p130
      %p132 = scmp.ne.s32.totalorder %s124, %s126
      %p133 = scmp.eq.s32.totalorder %s27, 1
      %p134 = por %p132, %p133
      %p135 = scmp.ne.s32.totalorder %s126, %s127
      %p136 = scmp.eq.s32.totalorder %s27, 0
      %p137 = por %p135, %p136
      %p138 = scmp.ne.s32.totalorder %s126, %s127
      %p139 = scmp.eq.s32.totalorder %s28, 1
      %p140 = por %p138, %p139
      %p142 = scmp.ne.s32.totalorder %s127, %s141
      %p143 = scmp.eq.s32.totalorder %s28, 0
      %p144 = por %p142, %p143
      %s146 = sadd.s32 %s145, 1
      %p149 = scmp.eq.s32.totalorder %s22, 1
      %p150 = scmp.ne.s32.totalorder %s145, %s147
      %p151 = scmp.eq.s32.totalorder %s22, 0
      %p152 = por %p150, %p151
      %p153 = scmp.ne.s32.totalorder %s145, %s147
      %p154 = scmp.eq.s32.totalorder %s27, 1
      %p155 = por %p153, %p154
      %p156 = scmp.ne.s32.totalorder %s147, %s148
      %p157 = scmp.eq.s32.totalorder %s27, 0
      %p158 = por %p156, %p157
      %p159 = scmp.ne.s32.totalorder %s147, %s148
      %p160 = scmp.eq.s32.totalorder %s28, 1
      %p161 = por %p159, %p160
      %p163 = scmp.ne.s32.totalorder %s148, %s162
      %p164 = scmp.eq.s32.totalorder %s28, 0
      %p165 = por %p163, %p164
      %s166 = ssub.s32 %s22, %s29
      %p167 = scmp.eq.s32.totalorder %s166, 0
      %s169 = sadd.s32 %s168, 1
      %s170 = scalar_select %p167, %s168, %s169
      %p173 = pneg %p167
      %p174 = scmp.eq.s32.totalorder %s22, 1
      %p175 = por %p173, %p174
      %p176 = scmp.ne.s32.totalorder %s168, %s171
      %p177 = scmp.eq.s32.totalorder %s22, 0
      %p178 = por %p176, %p177
      %p179 = scmp.ne.s32.totalorder %s168, %s171
      %p180 = scmp.eq.s32.totalorder %s27, 1
      %p181 = por %p179, %p180
      %p182 = scmp.ne.s32.totalorder %s171, %s172
      %p183 = scmp.eq.s32.totalorder %s27, 0
      %p184 = por %p182, %p183
      %p185 = scmp.ne.s32.totalorder %s171, %s172
      %p186 = scmp.eq.s32.totalorder %s28, 1
      %p187 = por %p185, %p186
      %p189 = scmp.ne.s32.totalorder %s172, %s188
      %p190 = scmp.eq.s32.totalorder %s28, 0
      %p191 = por %p189, %p190
      %p192 = scmp.le.s32.totalorder 1, %s22
      %p193 = scmp.lt.s32.totalorder %s22, 3
      %p194 = pnand %p192, %p193
      %p195 = pneg %p194
      // Predicated region
      $region9: #{tpu_custom_call.1} parent=5 // pred_check
        _
      $region10: #{tpu_custom_call.1} parent=5 // pred_check_branch
        %197 = sbr.rel (%p194) target = $region12
      $region11: #{tpu_custom_call.1} parent=5 // pred_region
        %s198 = ssub.s32 %s22, 1
        // Predicated region
        $region13: #{tpu_custom_call.1} parent=11 // pred_check
          %p199 = pneg %p95
        $region14: #{tpu_custom_call.1} parent=11 // pred_check_branch
          %201 = sbr.rel (%p199) target = $region16
        $region15: #{tpu_custom_call.1} parent=11 // pred_region
          %s203 = ssub.s32 512, 512
          %204 = vsyncadd [#allocation7], %s203
          %s205 = sshll.u32 [#allocation8], 4
          %s206 = int_to_ptr.vmem [resolvable:$true] %s205
          %211 = dma.hbm_to_vmem [thread:$0]  %s2, 512, %s206, [#allocation7], 128, 128, 8
        $region16: #{tpu_custom_call.1} parent=11 // pred_fallthru
          _
        // Predicated region
        $region17: #{tpu_custom_call.1} parent=11 // pred_check
          %p212 = pneg %p116
        $region18: #{tpu_custom_call.1} parent=11 // pred_check_branch
          %214 = sbr.rel (%p212) target = $region20
        $region19: #{tpu_custom_call.1} parent=11 // pred_region
          _
        $region20: #{tpu_custom_call.1} parent=11 // pred_fallthru
          _
        // Predicated region
        $region21: #{tpu_custom_call.1} parent=11 // pred_check
          %p215 = pneg %p137
        $region22: #{tpu_custom_call.1} parent=11 // pred_check_branch
          %217 = sbr.rel (%p215) target = $region24
        $region23: #{tpu_custom_call.1} parent=11 // pred_region
          _
        $region24: #{tpu_custom_call.1} parent=11 // pred_fallthru
          _
        // Predicated region
        $region25: #{tpu_custom_call.1} parent=11 // pred_check
          %p218 = pneg %p158
        $region26: #{tpu_custom_call.1} parent=11 // pred_check_branch
          %220 = sbr.rel (%p218) target = $region28
        $region27: #{tpu_custom_call.1} parent=11 // pred_region
          _
        $region28: #{tpu_custom_call.1} parent=11 // pred_fallthru
          _
      $region12: #{tpu_custom_call.1} parent=5 // pred_fallthru
        _
      %p221 = scmp.lt.s32.totalorder %s22, 2
      // Predicated region
      $region29: #{tpu_custom_call.1} parent=5 // pred_check
        %p222 = pneg %p221
      $region30: #{tpu_custom_call.1} parent=5 // pred_check_branch
        %224 = sbr.rel (%p222) target = $region32
      $region31: #{tpu_custom_call.1} parent=5 // pred_region
        // Predicated region
        $region33: #{tpu_custom_call.1} parent=31 // pred_check
          %p225 = pneg %p42
        $region34: #{tpu_custom_call.1} parent=31 // pred_check_branch
          %227 = sbr.rel (%p225) target = $region36
        $region35: #{tpu_custom_call.1} parent=31 // pred_region
          %s228 = sand.u32 %s32, 1
          %s229 = scalar_lea.sflag [#allocation4], %s228
          %s230 = sand.u32 %s32, 1
          %s231 = smul.addr %s230, 80
          %s232 = scalar_lea.vmem [#allocation3], %s231
          %s234 = ssub.s32 1280, 1280
          %235 = vsyncadd %s229, %s234
          %s236 = smul.addr %s22, 128
          %s237 = scalar_lea.hbm %s0, %s236
          %s238 = sshll.u32 %s232, 4
          %s239 = int_to_ptr.vmem [resolvable:$true] %s238
          %244 = dma.hbm_to_vmem [thread:$0]  %s237, 1280, %s239, %s229, 256, 128, 8
        $region36: #{tpu_custom_call.1} parent=31 // pred_fallthru
          _
        // Predicated region
        $region37: #{tpu_custom_call.1} parent=31 // pred_check
          %p245 = pneg %p68
        $region38: #{tpu_custom_call.1} parent=31 // pred_check_branch
          %247 = sbr.rel (%p245) target = $region40
        $region39: #{tpu_custom_call.1} parent=31 // pred_region
          %s248 = sand.u32 %s22, 1
          %s249 = scalar_lea.sflag [#allocation7], %s248
          %s250 = sand.u32 %s58, 1
          %s251 = smul.addr %s250, 80
          %s252 = scalar_lea.vmem [#allocation6], %s251
          %s254 = ssub.s32 1280, 1280
          %255 = vsyncadd %s249, %s254
          %s256 = smul.addr %s22, 128
          %s257 = scalar_lea.hbm %s1, %s256
          %s258 = sshll.u32 %s252, 4
          %s259 = int_to_ptr.vmem [resolvable:$true] %s258
          %264 = dma.hbm_to_vmem [thread:$0]  %s257, 1280, %s259, %s249, 256, 128, 8
        $region40: #{tpu_custom_call.1} parent=31 // pred_fallthru
          _
      $region32: #{tpu_custom_call.1} parent=5 // pred_fallthru
        _
      %p265 = scmp.le.s32.totalorder 1, %s22
      %p266 = scmp.lt.s32.totalorder %s22, 3
      %p267 = pnand %p265, %p266
      %p268 = pneg %p267
      // Predicated region
      $region41: #{tpu_custom_call.1} parent=5 // pred_check
        _
      $region42: #{tpu_custom_call.1} parent=5 // pred_check_branch
        %270 = sbr.rel (%p267) target = $region44
      $region43: #{tpu_custom_call.1} parent=5 // pred_region
        %s271 = ssub.s32 %s22, 1
        %s272 = sand.u32 %s35, 1
        %s273 = scalar_lea.sflag [#allocation4], %s272
        %s274 = sand.u32 %s35, 1
        %s275 = smul.addr %s274, 80
        %s276 = scalar_lea.vmem [#allocation3], %s275
        // Predicated region
        $region45: #{tpu_custom_call.1} parent=43 // pred_check
          %p277 = pneg %p48
        $region46: #{tpu_custom_call.1} parent=43 // pred_check_branch
          %279 = sbr.rel (%p277) target = $region48
        $region47: #{tpu_custom_call.1} parent=43 // pred_region
          %280 = dma.done %s273, 1280
        $region48: #{tpu_custom_call.1} parent=43 // pred_fallthru
          _
        %s281 = sand.u32 %s27, 1
        %s282 = scalar_lea.sflag [#allocation7], %s281
        %s283 = sand.u32 %s61, 1
        %s284 = smul.addr %s283, 80
        %s285 = scalar_lea.vmem [#allocation6], %s284
        // Predicated region
        $region49: #{tpu_custom_call.1} parent=43 // pred_check
          %p286 = pneg %p74
        $region50: #{tpu_custom_call.1} parent=43 // pred_check_branch
          %288 = sbr.rel (%p286) target = $region52
        $region51: #{tpu_custom_call.1} parent=43 // pred_region
          %289 = dma.done %s282, 1280
        $region52: #{tpu_custom_call.1} parent=43 // pred_fallthru
          _
        // Predicated region
        $region53: #{tpu_custom_call.1} parent=43 // pred_check
          %p290 = pneg %p95
        $region54: #{tpu_custom_call.1} parent=43 // pred_check_branch
          %292 = sbr.rel (%p290) target = $region56
        $region55: #{tpu_custom_call.1} parent=43 // pred_region
          %293 = dma.done [#allocation7], 512
        $region56: #{tpu_custom_call.1} parent=43 // pred_fallthru
          _
        %s294 = sand.u32 %s35, 1
        %s295 = scalar_lea.sflag [#allocation4], %s294
        %s296 = sand.u32 %s35, 1
        %s297 = smul.addr %s296, 80
        %s298 = scalar_lea.vmem [#allocation3], %s297
        %p299 = pneg %p48
        %p300 = pneg %p45
        %s301 = sand.u32 %s27, 1
        %s302 = scalar_lea.sflag [#allocation7], %s301
        %s303 = sand.u32 %s61, 1
        %s304 = smul.addr %s303, 80
        %s305 = scalar_lea.vmem [#allocation6], %s304
        %p306 = pneg %p74
        %p307 = pneg %p71
        %p308 = pneg %p95
        %p309 = pneg %p92
        %p310 = pneg %p116
        %p311 = pneg %p113
        %p312 = pneg %p137
        %p313 = pneg %p134
        %p314 = pneg %p158
        %p315 = pneg %p155
        %p316 = pneg %p184
        %p317 = pneg %p181
        %s318 = sand.u32 %s171, 1
        %s319 = scalar_lea.sflag [#allocation5], %s318
        %s320 = sand.u32 %s171, 1
        %s321 = smul.addr %s320, 8
        %s322 = scalar_lea.vmem [#allocation9], %s321
        %v323 = vld [vmem:[%s285] sm:$0xff]
        %v324 = vld [vmem:[%s285 + $0x8] sm:$0xff]
        %v325 = vld [vmem:[%s285 + $0x10] sm:$0xff]
        %v326 = vld [vmem:[%s285 + $0x18] sm:$0xff]
        %v327 = vld [vmem:[%s285 + $0x20] sm:$0xff]
        %s328 = scalar_lea.vmem %s285, 40 [#allocation6]
        %v329 = vld [vmem:[%s328] sm:$0xff]
        %v330 = vld [vmem:[%s328 + $0x8] sm:$0xff]
        %v331 = vld [vmem:[%s328 + $0x10] sm:$0xff]
        %v332 = vld [vmem:[%s328 + $0x18] sm:$0xff]
        %v333 = vld [vmem:[%s328 + $0x20] sm:$0xff]
        %v334 = vld [vmem:[%s276] sm:$0xff]
        %v335 = vld [vmem:[%s276 + $0x8] sm:$0xff]
        %v336 = vld [vmem:[%s276 + $0x10] sm:$0xff]
        %v337 = vld [vmem:[%s276 + $0x18] sm:$0xff]
        %v338 = vld [vmem:[%s276 + $0x20] sm:$0xff]
        %s339 = scalar_lea.vmem %s276, 40 [#allocation3]
        %v340 = vld [vmem:[%s339] sm:$0xff]
        %v341 = vld [vmem:[%s339 + $0x8] sm:$0xff]
        %v342 = vld [vmem:[%s339 + $0x10] sm:$0xff]
        %v343 = vld [vmem:[%s339 + $0x18] sm:$0xff]
        %v344 = vld [vmem:[%s339 + $0x20] sm:$0xff]
        %v345 = vsub.f32 %v329, %v323
        %v346 = vsub.f32 %v330, %v324
        %v347 = vsub.f32 %v331, %v325
        %v348 = vsub.f32 %v332, %v326
        %v349 = vsub.f32 %v333, %v327
        %v350 = vmul.f32 %v345, 1.442695
        %v351 = vpow.pop %v350
        %v352 = vmul.f32 %v346, 1.442695
        %v353 = vpow.pop %v352
        %v354 = vmul.f32 %v347, 1.442695
        %v355 = vpow.pop %v354
        %v356 = vmul.f32 %v348, 1.442695
        %v357 = vpow.pop %v356
        %v358 = vmul.f32 %v349, 1.442695
        %v359 = vpow.pop %v358
        %v360 = vadd.f32 %v351, 1.0
        %v361 = vadd.f32 %v353, 1.0
        %v362 = vadd.f32 %v355, 1.0
        %v363 = vadd.f32 %v357, 1.0
        %v364 = vadd.f32 %v359, 1.0
        %v365 = vrcp.pop %v360
        %v366 = vrcp.pop %v361
        %v367 = vrcp.pop %v362
        %v368 = vrcp.pop %v363
        %v369 = vrcp.pop %v364
        %v370 = vsub.f32 %v334, %v340
        %v371 = vsub.f32 %v335, %v341
        %v372 = vsub.f32 %v336, %v342
        %v373 = vsub.f32 %v337, %v343
        %v374 = vsub.f32 %v338, %v344
        %v375 = vmul.f32 %v370, %v365
        %v376 = vmul.f32 %v371, %v366
        %v377 = vmul.f32 %v372, %v367
        %v378 = vmul.f32 %v373, %v368
        %v379 = vmul.f32 %v374, %v369
        %v380 = vadd.f32 %v340, %v375
        %v381 = vadd.f32 %v341, %v376
        %v382 = vadd.f32 %v342, %v377
        %v383 = vadd.f32 %v343, %v378
        %v384 = vadd.f32 %v344, %v379
        %v385 = vld [vmem:[#allocation8] sm:$0xff]
        %v386 = vld [vmem:[#allocation8 + $0x8] sm:$0xff]
        %v387 = vld [vmem:[#allocation8 + $0x10] sm:$0xff]
        %v388 = vld [vmem:[#allocation8 + $0x18] sm:$0xff]
        %v389 = vld [vmem:[%s3] sm:$0x1]
        %v391 = vlaneseq
        %v392 = vshrl.u32 %v391, 7
        %v393 = vsub.s32 0, %v392
        %v394 = vrot.slane %v389, %v393
        %vm396 = vcmask 261120
        %v398 = vsel %vm396, %v380, 0
        %v401 = vsel %vm396, %v381, 0
        %v404 = vsel %vm396, %v382, 0
        %v407 = vsel %vm396, %v383, 0
        %v410 = vsel %vm396, %v384, 0
        %412 = vmatprep.subr.mxu0 0.0
        %413 = vmatpush1.msra.mxu0 0.0
        %414 = vmatprep.subr.mxu0 0.0
        %415 = vmatpush1.msra.mxu0 0.0
        %416 = vmatprep.subr.mxu0 0.0
        %417 = vmatpush1.msra.mxu0 0.0
        %418 = vmatprep.subr.mxu0 0.0
        %419 = vmatpush1.msra.mxu0 0.0
        %420 = vmatprep.subr.mxu0 0.0
        %421 = vmatpush1.msra.mxu0 0.0
        %422 = vmatprep.subr.mxu0 0.0
        %423 = vmatpush1.msra.mxu0 0.0
        %424 = vmatprep.subr.mxu0 0.0
        %425 = vmatpush1.msra.mxu0 0.0
        %426 = vmatprep.subr.mxu0 0.0
        %427 = vmatpush1.msra.mxu0 0.0
        %428 = vmatprep.subr.mxu0 0.0
        %429 = vmatpush1.msra.mxu0 0.0
        %430 = vmatprep.subr.mxu0 0.0
        %431 = vmatpush1.msra.mxu0 0.0
        %432 = vmatprep.subr.mxu0 0.0
        %433 = vmatpush1.msra.mxu0 0.0
        %434 = vmatprep.subr.mxu0 0.0
        %435 = vmatpush1.msra.mxu0 0.0
        %436 = vmatprep.subr.mxu0 0.0
        %v437 = vand.u32 %v388, 4294901760
        %438 = vmatpush1.msra.mxu0 %v437
        %439 = vmatprep.subr.mxu0 0.0
        %v440 = vand.u32 %v387, 4294901760
        %441 = vmatpush1.msra.mxu0 %v440
        %442 = vmatprep.subr.mxu0 0.0
        %v443 = vand.u32 %v386, 4294901760
        %444 = vmatpush1.msra.mxu0 %v443
        %445 = vmatprep.subr.mxu0 0.0
        %v446 = vand.u32 %v385, 4294901760
        %447 = vmatpush1.msra.mxu0 %v446
        %448 = vmatprep.subr.mxu0 0.0
        %449 = vmatpush2.msra.mxu0 0.0
        %450 = vmatprep.subr.mxu0 0.0
        %451 = vmatpush2.msra.mxu0 0.0
        %452 = vmatprep.subr.mxu0 0.0
        %453 = vmatpush2.msra.mxu0 0.0
        %454 = vmatprep.subr.mxu0 0.0
        %455 = vmatpush2.msra.mxu0 0.0
        %456 = vmatprep.subr.mxu0 0.0
        %457 = vmatpush2.msra.mxu0 0.0
        %458 = vmatprep.subr.mxu0 0.0
        %459 = vmatpush2.msra.mxu0 0.0
        %460 = vmatprep.subr.mxu0 0.0
        %461 = vmatpush2.msra.mxu0 0.0
        %462 = vmatprep.subr.mxu0 0.0
        %463 = vmatpush2.msra.mxu0 0.0
        %464 = vmatprep.subr.mxu0 0.0
        %465 = vmatpush2.msra.mxu0 0.0
        %466 = vmatprep.subr.mxu0 0.0
        %467 = vmatpush2.msra.mxu0 0.0
        %468 = vmatprep.subr.mxu0 0.0
        %469 = vmatpush2.msra.mxu0 0.0
        %470 = vmatprep.subr.mxu0 0.0
        %471 = vmatpush2.msra.mxu0 0.0
        %472 = vmatprep.subr.mxu0 0.0
        %473 = vmatpush2.msra.mxu0 0.0
        %474 = vmatprep.subr.mxu0 0.0
        %475 = vmatpush2.msra.mxu0 0.0
        %476 = vmatprep.subr.mxu0 0.0
        %477 = vmatpush2.msra.mxu0 0.0
        %478 = vmatprep.subr.mxu0 0.0
        %479 = vmatpush2.msra.mxu0 0.0
        %480 = vmatprep.mubr.f32.mxu0 0.0
        %v481 = vand.u32 %v398, 4294901760
        %v482 = vsub.f32 %v398, %v481
        %v483 = vand.u32 %v482, 4294901760
        %v484 = vsub.f32 %v482, %v483
        %v485 = vand.u32 %v484, 4294901760
        %486 = vmatmul.mubr.f32.gmra.mxu0 %v485
        %v487 = vpop.f32.mrf.mxu0
        %v488 = vadd.f32 %v394, %v487
        %v489 = vpop.f32.mrf.mxu0
        %490 = vmatprep.mubr.f32.mxu0 0.0
        %v491 = vand.u32 %v401, 4294901760
        %v492 = vsub.f32 %v401, %v491
        %v493 = vand.u32 %v492, 4294901760
        %v494 = vsub.f32 %v492, %v493
        %v495 = vand.u32 %v494, 4294901760
        %496 = vmatmul.mubr.f32.gmra.mxu0 %v495
        %v497 = vpop.f32.mrf.mxu0
        %v498 = vadd.f32 %v394, %v497
        %v499 = vpop.f32.mrf.mxu0
        %500 = vmatprep.mubr.f32.mxu0 0.0
        %v501 = vand.u32 %v404, 4294901760
        %v502 = vsub.f32 %v404, %v501
        %v503 = vand.u32 %v502, 4294901760
        %v504 = vsub.f32 %v502, %v503
        %v505 = vand.u32 %v504, 4294901760
        %506 = vmatmul.mubr.f32.gmra.mxu0 %v505
        %v507 = vpop.f32.mrf.mxu0
        %v508 = vadd.f32 %v394, %v507
        %v509 = vpop.f32.mrf.mxu0
        %510 = vmatprep.mubr.f32.mxu0 0.0
        %v511 = vand.u32 %v407, 4294901760
        %v512 = vsub.f32 %v407, %v511
        %v513 = vand.u32 %v512, 4294901760
        %v514 = vsub.f32 %v512, %v513
        %v515 = vand.u32 %v514, 4294901760
        %516 = vmatmul.mubr.f32.gmra.mxu0 %v515
        %v517 = vpop.f32.mrf.mxu0
        %v518 = vadd.f32 %v394, %v517
        %v519 = vpop.f32.mrf.mxu0
        %520 = vmatprep.mubr.f32.mxu0 0.0
        %v521 = vand.u32 %v410, 4294901760
        %v522 = vsub.f32 %v410, %v521
        %v523 = vand.u32 %v522, 4294901760
        %v524 = vsub.f32 %v522, %v523
        %v525 = vand.u32 %v524, 4294901760
        %526 = vmatmul.mubr.f32.gmra.mxu0 %v525
        %v527 = vpop.f32.mrf.mxu0
        %v528 = vadd.f32 %v394, %v527
        %v529 = vpop.f32.mrf.mxu0
        %530 = vdwg.mxu0
        %531 = vmatprep.subr.mxu0 0.0
        %532 = vmatpush1.msra.mxu0 0.0
        %533 = vmatprep.subr.mxu0 0.0
        %534 = vmatpush1.msra.mxu0 0.0
        %535 = vmatprep.subr.mxu0 0.0
        %536 = vmatpush1.msra.mxu0 0.0
        %537 = vmatprep.subr.mxu0 0.0
        %538 = vmatpush1.msra.mxu0 0.0
        %539 = vmatprep.subr.mxu0 0.0
        %540 = vmatpush1.msra.mxu0 0.0
        %541 = vmatprep.subr.mxu0 0.0
        %542 = vmatpush1.msra.mxu0 0.0
        %543 = vmatprep.subr.mxu0 0.0
        %544 = vmatpush1.msra.mxu0 0.0
        %545 = vmatprep.subr.mxu0 0.0
        %546 = vmatpush1.msra.mxu0 0.0
        %547 = vmatprep.subr.mxu0 0.0
        %548 = vmatpush1.msra.mxu0 0.0
        %549 = vmatprep.subr.mxu0 0.0
        %550 = vmatpush1.msra.mxu0 0.0
        %551 = vmatprep.subr.mxu0 0.0
        %552 = vmatpush1.msra.mxu0 0.0
        %553 = vmatprep.subr.mxu0 0.0
        %554 = vmatpush1.msra.mxu0 0.0
        %555 = vmatprep.subr.mxu0 0.0
        %v556 = vand.u32 %v388, 4294901760
        %v557 = vsub.f32 %v388, %v556
        %v558 = vand.u32 %v557, 4294901760
        %v559 = vsub.f32 %v557, %v558
        %v560 = vand.u32 %v559, 4294901760
        %561 = vmatpush1.msra.mxu0 %v560
        %562 = vmatprep.subr.mxu0 0.0
        %v563 = vand.u32 %v387, 4294901760
        %v564 = vsub.f32 %v387, %v563
        %v565 = vand.u32 %v564, 4294901760
        %v566 = vsub.f32 %v564, %v565
        %v567 = vand.u32 %v566, 4294901760
        %568 = vmatpush1.msra.mxu0 %v567
        %569 = vmatprep.subr.mxu0 0.0
        %v570 = vand.u32 %v386, 4294901760
        %v571 = vsub.f32 %v386, %v570
        %v572 = vand.u32 %v571, 4294901760
        %v573 = vsub.f32 %v571, %v572
        %v574 = vand.u32 %v573, 4294901760
        %575 = vmatpush1.msra.mxu0 %v574
        %576 = vmatprep.subr.mxu0 0.0
        %v577 = vand.u32 %v385, 4294901760
        %v578 = vsub.f32 %v385, %v577
        %v579 = vand.u32 %v578, 4294901760
        %v580 = vsub.f32 %v578, %v579
        %v581 = vand.u32 %v580, 4294901760
        %582 = vmatpush1.msra.mxu0 %v581
        %583 = vmatprep.subr.mxu0 0.0
        %584 = vmatpush2.msra.mxu0 0.0
        %585 = vmatprep.subr.mxu0 0.0
        %586 = vmatpush2.msra.mxu0 0.0
        %587 = vmatprep.subr.mxu0 0.0
        %588 = vmatpush2.msra.mxu0 0.0
        %589 = vmatprep.subr.mxu0 0.0
        %590 = vmatpush2.msra.mxu0 0.0
        %591 = vmatprep.subr.mxu0 0.0
        %592 = vmatpush2.msra.mxu0 0.0
        %593 = vmatprep.subr.mxu0 0.0
        %594 = vmatpush2.msra.mxu0 0.0
        %595 = vmatprep.subr.mxu0 0.0
        %596 = vmatpush2.msra.mxu0 0.0
        %597 = vmatprep.subr.mxu0 0.0
        %598 = vmatpush2.msra.mxu0 0.0
        %599 = vmatprep.subr.mxu0 0.0
        %600 = vmatpush2.msra.mxu0 0.0
        %601 = vmatprep.subr.mxu0 0.0
        %602 = vmatpush2.msra.mxu0 0.0
        %603 = vmatprep.subr.mxu0 0.0
        %604 = vmatpush2.msra.mxu0 0.0
        %605 = vmatprep.subr.mxu0 0.0
        %606 = vmatpush2.msra.mxu0 0.0
        %607 = vmatprep.subr.mxu0 0.0
        %608 = vmatpush2.msra.mxu0 0.0
        %609 = vmatprep.subr.mxu0 0.0
        %610 = vmatpush2.msra.mxu0 0.0
        %611 = vmatprep.subr.mxu0 0.0
        %612 = vmatpush2.msra.mxu0 0.0
        %613 = vmatprep.subr.mxu0 0.0
        %614 = vmatpush2.msra.mxu0 0.0
        %615 = vmatprep.mubr.f32.mxu0 0.0
        %v616 = vand.u32 %v398, 4294901760
        %617 = vmatmul.mubr.f32.gmra.mxu0 %v616
        %v618 = vpop.f32.mrf.mxu0
        %v619 = vadd.f32 %v488, %v618
        %v620 = vpop.f32.mrf.mxu0
        %621 = vmatprep.mubr.f32.mxu0 0.0
        %v622 = vand.u32 %v401, 4294901760
        %623 = vmatmul.mubr.f32.gmra.mxu0 %v622
        %v624 = vpop.f32.mrf.mxu0
        %v625 = vadd.f32 %v498, %v624
        %v626 = vpop.f32.mrf.mxu0
        %627 = vmatprep.mubr.f32.mxu0 0.0
        %v628 = vand.u32 %v404, 4294901760
        %629 = vmatmul.mubr.f32.gmra.mxu0 %v628
        %v630 = vpop.f32.mrf.mxu0
        %v631 = vadd.f32 %v508, %v630
        %v632 = vpop.f32.mrf.mxu0
        %633 = vmatprep.mubr.f32.mxu0 0.0
        %v634 = vand.u32 %v407, 4294901760
        %635 = vmatmul.mubr.f32.gmra.mxu0 %v634
        %v636 = vpop.f32.mrf.mxu0
        %v637 = vadd.f32 %v518, %v636
        %v638 = vpop.f32.mrf.mxu0
        %639 = vmatprep.mubr.f32.mxu0 0.0
        %v640 = vand.u32 %v410, 4294901760
        %641 = vmatmul.mubr.f32.gmra.mxu0 %v640
        %v642 = vpop.f32.mrf.mxu0
        %v643 = vadd.f32 %v528, %v642
        %v644 = vpop.f32.mrf.mxu0
        %645 = vdwg.mxu0
        %646 = vmatprep.subr.mxu0 0.0
        %647 = vmatpush1.msra.mxu0 0.0
        %648 = vmatprep.subr.mxu0 0.0
        %649 = vmatpush1.msra.mxu0 0.0
        %650 = vmatprep.subr.mxu0 0.0
        %651 = vmatpush1.msra.mxu0 0.0
        %652 = vmatprep.subr.mxu0 0.0
        %653 = vmatpush1.msra.mxu0 0.0
        %654 = vmatprep.subr.mxu0 0.0
        %655 = vmatpush1.msra.mxu0 0.0
        %656 = vmatprep.subr.mxu0 0.0
        %657 = vmatpush1.msra.mxu0 0.0
        %658 = vmatprep.subr.mxu0 0.0
        %659 = vmatpush1.msra.mxu0 0.0
        %660 = vmatprep.subr.mxu0 0.0
        %661 = vmatpush1.msra.mxu0 0.0
        %662 = vmatprep.subr.mxu0 0.0
        %663 = vmatpush1.msra.mxu0 0.0
        %664 = vmatprep.subr.mxu0 0.0
        %665 = vmatpush1.msra.mxu0 0.0
        %666 = vmatprep.subr.mxu0 0.0
        %667 = vmatpush1.msra.mxu0 0.0
        %668 = vmatprep.subr.mxu0 0.0
        %669 = vmatpush1.msra.mxu0 0.0
        %670 = vmatprep.subr.mxu0 0.0
        %v671 = vand.u32 %v388, 4294901760
        %v672 = vsub.f32 %v388, %v671
        %673 = vmatpush1.msra.mxu0 %v672
        %674 = vmatprep.subr.mxu0 0.0
        %v675 = vand.u32 %v387, 4294901760
        %v676 = vsub.f32 %v387, %v675
        %677 = vmatpush1.msra.mxu0 %v676
        %678 = vmatprep.subr.mxu0 0.0
        %v679 = vand.u32 %v386, 4294901760
        %v680 = vsub.f32 %v386, %v679
        %681 = vmatpush1.msra.mxu0 %v680
        %682 = vmatprep.subr.mxu0 0.0
        %v683 = vand.u32 %v385, 4294901760
        %v684 = vsub.f32 %v385, %v683
        %685 = vmatpush1.msra.mxu0 %v684
        %686 = vmatprep.subr.mxu0 0.0
        %687 = vmatpush2.msra.mxu0 0.0
        %688 = vmatprep.subr.mxu0 0.0
        %689 = vmatpush2.msra.mxu0 0.0
        %690 = vmatprep.subr.mxu0 0.0
        %691 = vmatpush2.msra.mxu0 0.0
        %692 = vmatprep.subr.mxu0 0.0
        %693 = vmatpush2.msra.mxu0 0.0
        %694 = vmatprep.subr.mxu0 0.0
        %695 = vmatpush2.msra.mxu0 0.0
        %696 = vmatprep.subr.mxu0 0.0
        %697 = vmatpush2.msra.mxu0 0.0
        %698 = vmatprep.subr.mxu0 0.0
        %699 = vmatpush2.msra.mxu0 0.0
        %700 = vmatprep.subr.mxu0 0.0
        %701 = vmatpush2.msra.mxu0 0.0
        %702 = vmatprep.subr.mxu0 0.0
        %703 = vmatpush2.msra.mxu0 0.0
        %704 = vmatprep.subr.mxu0 0.0
        %705 = vmatpush2.msra.mxu0 0.0
        %706 = vmatprep.subr.mxu0 0.0
        %707 = vmatpush2.msra.mxu0 0.0
        %708 = vmatprep.subr.mxu0 0.0
        %709 = vmatpush2.msra.mxu0 0.0
        %710 = vmatprep.subr.mxu0 0.0
        %711 = vmatpush2.msra.mxu0 0.0
        %712 = vmatprep.subr.mxu0 0.0
        %713 = vmatpush2.msra.mxu0 0.0
        %714 = vmatprep.subr.mxu0 0.0
        %715 = vmatpush2.msra.mxu0 0.0
        %716 = vmatprep.subr.mxu0 0.0
        %717 = vmatpush2.msra.mxu0 0.0
        %718 = vmatprep.mubr.f32.mxu0 0.0
        %v719 = vand.u32 %v398, 4294901760
        %v720 = vsub.f32 %v398, %v719
        %721 = vmatmul.mubr.f32.gmra.mxu0 %v720
        %v722 = vpop.f32.mrf.mxu0
        %v723 = vadd.f32 %v619, %v722
        %v724 = vpop.f32.mrf.mxu0
        %725 = vmatprep.mubr.f32.mxu0 0.0
        %v726 = vand.u32 %v401, 4294901760
        %v727 = vsub.f32 %v401, %v726
        %728 = vmatmul.mubr.f32.gmra.mxu0 %v727
        %v729 = vpop.f32.mrf.mxu0
        %v730 = vadd.f32 %v625, %v729
        %v731 = vpop.f32.mrf.mxu0
        %732 = vmatprep.mubr.f32.mxu0 0.0
        %v733 = vand.u32 %v404, 4294901760
        %v734 = vsub.f32 %v404, %v733
        %735 = vmatmul.mubr.f32.gmra.mxu0 %v734
        %v736 = vpop.f32.mrf.mxu0
        %v737 = vadd.f32 %v631, %v736
        %v738 = vpop.f32.mrf.mxu0
        %739 = vmatprep.mubr.f32.mxu0 0.0
        %v740 = vand.u32 %v407, 4294901760
        %v741 = vsub.f32 %v407, %v740
        %742 = vmatmul.mubr.f32.gmra.mxu0 %v741
        %v743 = vpop.f32.mrf.mxu0
        %v744 = vadd.f32 %v637, %v743
        %v745 = vpop.f32.mrf.mxu0
        %746 = vmatprep.mubr.f32.mxu0 0.0
        %v747 = vand.u32 %v410, 4294901760
        %v748 = vsub.f32 %v410, %v747
        %749 = vmatmul.mubr.f32.gmra.mxu0 %v748
        %v750 = vpop.f32.mrf.mxu0
        %v751 = vadd.f32 %v643, %v750
        %v752 = vpop.f32.mrf.mxu0
        %753 = vdwg.mxu0
        %754 = vmatprep.subr.mxu0 0.0
        %755 = vmatpush1.msra.mxu0 0.0
        %756 = vmatprep.subr.mxu0 0.0
        %757 = vmatpush1.msra.mxu0 0.0
        %758 = vmatprep.subr.mxu0 0.0
        %759 = vmatpush1.msra.mxu0 0.0
        %760 = vmatprep.subr.mxu0 0.0
        %761 = vmatpush1.msra.mxu0 0.0
        %762 = vmatprep.subr.mxu0 0.0
        %763 = vmatpush1.msra.mxu0 0.0
        %764 = vmatprep.subr.mxu0 0.0
        %765 = vmatpush1.msra.mxu0 0.0
        %766 = vmatprep.subr.mxu0 0.0
        %767 = vmatpush1.msra.mxu0 0.0
        %768 = vmatprep.subr.mxu0 0.0
        %769 = vmatpush1.msra.mxu0 0.0
        %770 = vmatprep.subr.mxu0 0.0
        %771 = vmatpush1.msra.mxu0 0.0
        %772 = vmatprep.subr.mxu0 0.0
        %773 = vmatpush1.msra.mxu0 0.0
        %774 = vmatprep.subr.mxu0 0.0
        %775 = vmatpush1.msra.mxu0 0.0
        %776 = vmatprep.subr.mxu0 0.0
        %777 = vmatpush1.msra.mxu0 0.0
        %778 = vmatprep.subr.mxu0 0.0
        %v779 = vand.u32 %v388, 4294901760
        %780 = vmatpush1.msra.mxu0 %v779
        %781 = vmatprep.subr.mxu0 0.0
        %v782 = vand.u32 %v387, 4294901760
        %783 = vmatpush1.msra.mxu0 %v782
        %784 = vmatprep.subr.mxu0 0.0
        %v785 = vand.u32 %v386, 4294901760
        %786 = vmatpush1.msra.mxu0 %v785
        %787 = vmatprep.subr.mxu0 0.0
        %v788 = vand.u32 %v385, 4294901760
        %789 = vmatpush1.msra.mxu0 %v788
        %790 = vmatprep.subr.mxu0 0.0
        %791 = vmatpush2.msra.mxu0 0.0
        %792 = vmatprep.subr.mxu0 0.0
        %793 = vmatpush2.msra.mxu0 0.0
        %794 = vmatprep.subr.mxu0 0.0
        %795 = vmatpush2.msra.mxu0 0.0
        %796 = vmatprep.subr.mxu0 0.0
        %797 = vmatpush2.msra.mxu0 0.0
        %798 = vmatprep.subr.mxu0 0.0
        %799 = vmatpush2.msra.mxu0 0.0
        %800 = vmatprep.subr.mxu0 0.0
        %801 = vmatpush2.msra.mxu0 0.0
        %802 = vmatprep.subr.mxu0 0.0
        %803 = vmatpush2.msra.mxu0 0.0
        %804 = vmatprep.subr.mxu0 0.0
        %805 = vmatpush2.msra.mxu0 0.0
        %806 = vmatprep.subr.mxu0 0.0
        %807 = vmatpush2.msra.mxu0 0.0
        %808 = vmatprep.subr.mxu0 0.0
        %809 = vmatpush2.msra.mxu0 0.0
        %810 = vmatprep.subr.mxu0 0.0
        %811 = vmatpush2.msra.mxu0 0.0
        %812 = vmatprep.subr.mxu0 0.0
        %813 = vmatpush2.msra.mxu0 0.0
        %814 = vmatprep.subr.mxu0 0.0
        %815 = vmatpush2.msra.mxu0 0.0
        %816 = vmatprep.subr.mxu0 0.0
        %817 = vmatpush2.msra.mxu0 0.0
        %818 = vmatprep.subr.mxu0 0.0
        %819 = vmatpush2.msra.mxu0 0.0
        %820 = vmatprep.subr.mxu0 0.0
        %821 = vmatpush2.msra.mxu0 0.0
        %822 = vmatprep.mubr.f32.mxu0 0.0
        %v823 = vand.u32 %v398, 4294901760
        %v824 = vsub.f32 %v398, %v823
        %v825 = vand.u32 %v824, 4294901760
        %826 = vmatmul.mubr.f32.gmra.mxu0 %v825
        %v827 = vpop.f32.mrf.mxu0
        %v828 = vadd.f32 %v723, %v827
        %v829 = vpop.f32.mrf.mxu0
        %830 = vmatprep.mubr.f32.mxu0 0.0
        %v831 = vand.u32 %v401, 4294901760
        %v832 = vsub.f32 %v401, %v831
        %v833 = vand.u32 %v832, 4294901760
        %834 = vmatmul.mubr.f32.gmra.mxu0 %v833
        %v835 = vpop.f32.mrf.mxu0
        %v836 = vadd.f32 %v730, %v835
        %v837 = vpop.f32.mrf.mxu0
        %838 = vmatprep.mubr.f32.mxu0 0.0
        %v839 = vand.u32 %v404, 4294901760
        %v840 = vsub.f32 %v404, %v839
        %v841 = vand.u32 %v840, 4294901760
        %842 = vmatmul.mubr.f32.gmra.mxu0 %v841
        %v843 = vpop.f32.mrf.mxu0
        %v844 = vadd.f32 %v737, %v843
        %v845 = vpop.f32.mrf.mxu0
        %846 = vmatprep.mubr.f32.mxu0 0.0
        %v847 = vand.u32 %v407, 4294901760
        %v848 = vsub.f32 %v407, %v847
        %v849 = vand.u32 %v848, 4294901760
        %850 = vmatmul.mubr.f32.gmra.mxu0 %v849
        %v851 = vpop.f32.mrf.mxu0
        %v852 = vadd.f32 %v744, %v851
        %v853 = vpop.f32.mrf.mxu0
        %854 = vmatprep.mubr.f32.mxu0 0.0
        %v855 = vand.u32 %v410, 4294901760
        %v856 = vsub.f32 %v410, %v855
        %v857 = vand.u32 %v856, 4294901760
        %858 = vmatmul.mubr.f32.gmra.mxu0 %v857
        %v859 = vpop.f32.mrf.mxu0
        %v860 = vadd.f32 %v751, %v859
        %v861 = vpop.f32.mrf.mxu0
        %862 = vdwg.mxu0
        %863 = vmatprep.subr.mxu0 0.0
        %864 = vmatpush1.msra.mxu0 0.0
        %865 = vmatprep.subr.mxu0 0.0
        %866 = vmatpush1.msra.mxu0 0.0
        %867 = vmatprep.subr.mxu0 0.0
        %868 = vmatpush1.msra.mxu0 0.0
        %869 = vmatprep.subr.mxu0 0.0
        %870 = vmatpush1.msra.mxu0 0.0
        %871 = vmatprep.subr.mxu0 0.0
        %872 = vmatpush1.msra.mxu0 0.0
        %873 = vmatprep.subr.mxu0 0.0
        %874 = vmatpush1.msra.mxu0 0.0
        %875 = vmatprep.subr.mxu0 0.0
        %876 = vmatpush1.msra.mxu0 0.0
        %877 = vmatprep.subr.mxu0 0.0
        %878 = vmatpush1.msra.mxu0 0.0
        %879 = vmatprep.subr.mxu0 0.0
        %880 = vmatpush1.msra.mxu0 0.0
        %881 = vmatprep.subr.mxu0 0.0
        %882 = vmatpush1.msra.mxu0 0.0
        %883 = vmatprep.subr.mxu0 0.0
        %884 = vmatpush1.msra.mxu0 0.0
        %885 = vmatprep.subr.mxu0 0.0
        %886 = vmatpush1.msra.mxu0 0.0
        %887 = vmatprep.subr.mxu0 0.0
        %v888 = vand.u32 %v388, 4294901760
        %v889 = vsub.f32 %v388, %v888
        %v890 = vand.u32 %v889, 4294901760
        %891 = vmatpush1.msra.mxu0 %v890
        %892 = vmatprep.subr.mxu0 0.0
        %v893 = vand.u32 %v387, 4294901760
        %v894 = vsub.f32 %v387, %v893
        %v895 = vand.u32 %v894, 4294901760
        %896 = vmatpush1.msra.mxu0 %v895
        %897 = vmatprep.subr.mxu0 0.0
        %v898 = vand.u32 %v386, 4294901760
        %v899 = vsub.f32 %v386, %v898
        %v900 = vand.u32 %v899, 4294901760
        %901 = vmatpush1.msra.mxu0 %v900
        %902 = vmatprep.subr.mxu0 0.0
        %v903 = vand.u32 %v385, 4294901760
        %v904 = vsub.f32 %v385, %v903
        %v905 = vand.u32 %v904, 4294901760
        %906 = vmatpush1.msra.mxu0 %v905
        %907 = vmatprep.subr.mxu0 0.0
        %908 = vmatpush2.msra.mxu0 0.0
        %909 = vmatprep.subr.mxu0 0.0
        %910 = vmatpush2.msra.mxu0 0.0
        %911 = vmatprep.subr.mxu0 0.0
        %912 = vmatpush2.msra.mxu0 0.0
        %913 = vmatprep.subr.mxu0 0.0
        %914 = vmatpush2.msra.mxu0 0.0
        %915 = vmatprep.subr.mxu0 0.0
        %916 = vmatpush2.msra.mxu0 0.0
        %917 = vmatprep.subr.mxu0 0.0
        %918 = vmatpush2.msra.mxu0 0.0
        %919 = vmatprep.subr.mxu0 0.0
        %920 = vmatpush2.msra.mxu0 0.0
        %921 = vmatprep.subr.mxu0 0.0
        %922 = vmatpush2.msra.mxu0 0.0
        %923 = vmatprep.subr.mxu0 0.0
        %924 = vmatpush2.msra.mxu0 0.0
        %925 = vmatprep.subr.mxu0 0.0
        %926 = vmatpush2.msra.mxu0 0.0
        %927 = vmatprep.subr.mxu0 0.0
        %928 = vmatpush2.msra.mxu0 0.0
        %929 = vmatprep.subr.mxu0 0.0
        %930 = vmatpush2.msra.mxu0 0.0
        %931 = vmatprep.subr.mxu0 0.0
        %932 = vmatpush2.msra.mxu0 0.0
        %933 = vmatprep.subr.mxu0 0.0
        %934 = vmatpush2.msra.mxu0 0.0
        %935 = vmatprep.subr.mxu0 0.0
        %936 = vmatpush2.msra.mxu0 0.0
        %937 = vmatprep.subr.mxu0 0.0
        %938 = vmatpush2.msra.mxu0 0.0
        %939 = vmatprep.mubr.f32.mxu0 0.0
        %v940 = vand.u32 %v398, 4294901760
        %941 = vmatmul.mubr.f32.gmra.mxu0 %v940
        %v942 = vpop.f32.mrf.mxu0
        %v943 = vadd.f32 %v828, %v942
        %v944 = vpop.f32.mrf.mxu0
        %945 = vmatprep.mubr.f32.mxu0 0.0
        %v946 = vand.u32 %v401, 4294901760
        %947 = vmatmul.mubr.f32.gmra.mxu0 %v946
        %v948 = vpop.f32.mrf.mxu0
        %v949 = vadd.f32 %v836, %v948
        %v950 = vpop.f32.mrf.mxu0
        %951 = vmatprep.mubr.f32.mxu0 0.0
        %v952 = vand.u32 %v404, 4294901760
        %953 = vmatmul.mubr.f32.gmra.mxu0 %v952
        %v954 = vpop.f32.mrf.mxu0
        %v955 = vadd.f32 %v844, %v954
        %v956 = vpop.f32.mrf.mxu0
        %957 = vmatprep.mubr.f32.mxu0 0.0
        %v958 = vand.u32 %v407, 4294901760
        %959 = vmatmul.mubr.f32.gmra.mxu0 %v958
        %v960 = vpop.f32.mrf.mxu0
        %v961 = vadd.f32 %v852, %v960
        %v962 = vpop.f32.mrf.mxu0
        %963 = vmatprep.mubr.f32.mxu0 0.0
        %v964 = vand.u32 %v410, 4294901760
        %965 = vmatmul.mubr.f32.gmra.mxu0 %v964
        %v966 = vpop.f32.mrf.mxu0
        %v967 = vadd.f32 %v860, %v966
        %v968 = vpop.f32.mrf.mxu0
        %969 = vdwg.mxu0
        %970 = vmatprep.subr.mxu0 0.0
        %971 = vmatpush1.msra.mxu0 0.0
        %972 = vmatprep.subr.mxu0 0.0
        %973 = vmatpush1.msra.mxu0 0.0
        %974 = vmatprep.subr.mxu0 0.0
        %975 = vmatpush1.msra.mxu0 0.0
        %976 = vmatprep.subr.mxu0 0.0
        %977 = vmatpush1.msra.mxu0 0.0
        %978 = vmatprep.subr.mxu0 0.0
        %979 = vmatpush1.msra.mxu0 0.0
        %980 = vmatprep.subr.mxu0 0.0
        %981 = vmatpush1.msra.mxu0 0.0
        %982 = vmatprep.subr.mxu0 0.0
        %983 = vmatpush1.msra.mxu0 0.0
        %984 = vmatprep.subr.mxu0 0.0
        %985 = vmatpush1.msra.mxu0 0.0
        %986 = vmatprep.subr.mxu0 0.0
        %987 = vmatpush1.msra.mxu0 0.0
        %988 = vmatprep.subr.mxu0 0.0
        %989 = vmatpush1.msra.mxu0 0.0
        %990 = vmatprep.subr.mxu0 0.0
        %991 = vmatpush1.msra.mxu0 0.0
        %992 = vmatprep.subr.mxu0 0.0
        %993 = vmatpush1.msra.mxu0 0.0
        %994 = vmatprep.subr.mxu0 0.0
        %v995 = vand.u32 %v388, 4294901760
        %996 = vmatpush1.msra.mxu0 %v995
        %997 = vmatprep.subr.mxu0 0.0
        %v998 = vand.u32 %v387, 4294901760
        %999 = vmatpush1.msra.mxu0 %v998
        %1000 = vmatprep.subr.mxu0 0.0
        %v1001 = vand.u32 %v386, 4294901760
        %1002 = vmatpush1.msra.mxu0 %v1001
        %1003 = vmatprep.subr.mxu0 0.0
        %v1004 = vand.u32 %v385, 4294901760
        %1005 = vmatpush1.msra.mxu0 %v1004
        %1006 = vmatprep.subr.mxu0 0.0
        %1007 = vmatpush2.msra.mxu0 0.0
        %1008 = vmatprep.subr.mxu0 0.0
        %1009 = vmatpush2.msra.mxu0 0.0
        %1010 = vmatprep.subr.mxu0 0.0
        %1011 = vmatpush2.msra.mxu0 0.0
        %1012 = vmatprep.subr.mxu0 0.0
        %1013 = vmatpush2.msra.mxu0 0.0
        %1014 = vmatprep.subr.mxu0 0.0
        %1015 = vmatpush2.msra.mxu0 0.0
        %1016 = vmatprep.subr.mxu0 0.0
        %1017 = vmatpush2.msra.mxu0 0.0
        %1018 = vmatprep.subr.mxu0 0.0
        %1019 = vmatpush2.msra.mxu0 0.0
        %1020 = vmatprep.subr.mxu0 0.0
        %1021 = vmatpush2.msra.mxu0 0.0
        %1022 = vmatprep.subr.mxu0 0.0
        %1023 = vmatpush2.msra.mxu0 0.0
        %1024 = vmatprep.subr.mxu0 0.0
        %1025 = vmatpush2.msra.mxu0 0.0
        %1026 = vmatprep.subr.mxu0 0.0
        %1027 = vmatpush2.msra.mxu0 0.0
        %1028 = vmatprep.subr.mxu0 0.0
        %1029 = vmatpush2.msra.mxu0 0.0
        %1030 = vmatprep.subr.mxu0 0.0
        %1031 = vmatpush2.msra.mxu0 0.0
        %1032 = vmatprep.subr.mxu0 0.0
        %1033 = vmatpush2.msra.mxu0 0.0
        %1034 = vmatprep.subr.mxu0 0.0
        %1035 = vmatpush2.msra.mxu0 0.0
        %1036 = vmatprep.subr.mxu0 0.0
        %1037 = vmatpush2.msra.mxu0 0.0
        %1038 = vmatprep.mubr.f32.mxu0 0.0
        %v1039 = vand.u32 %v398, 4294901760
        %1040 = vmatmul.mubr.f32.gmra.mxu0 %v1039
        %v1041 = vpop.f32.mrf.mxu0
        %v1042 = vadd.f32 %v943, %v1041
        %v1043 = vpop.f32.mrf.mxu0
        %1044 = vmatprep.mubr.f32.mxu0 0.0
        %v1045 = vand.u32 %v401, 4294901760
        %1046 = vmatmul.mubr.f32.gmra.mxu0 %v1045
        %v1047 = vpop.f32.mrf.mxu0
        %v1048 = vadd.f32 %v949, %v1047
        %v1049 = vpop.f32.mrf.mxu0
        %1050 = vmatprep.mubr.f32.mxu0 0.0
        %v1051 = vand.u32 %v404, 4294901760
        %1052 = vmatmul.mubr.f32.gmra.mxu0 %v1051
        %v1053 = vpop.f32.mrf.mxu0
        %v1054 = vadd.f32 %v955, %v1053
        %v1055 = vpop.f32.mrf.mxu0
        %1056 = vmatprep.mubr.f32.mxu0 0.0
        %v1057 = vand.u32 %v407, 4294901760
        %1058 = vmatmul.mubr.f32.gmra.mxu0 %v1057
        %v1059 = vpop.f32.mrf.mxu0
        %v1060 = vadd.f32 %v961, %v1059
        %v1061 = vpop.f32.mrf.mxu0
        %1062 = vmatprep.mubr.f32.mxu0 0.0
        %v1063 = vand.u32 %v410, 4294901760
        %1064 = vmatmul.mubr.f32.gmra.mxu0 %v1063
        %v1065 = vpop.f32.mrf.mxu0
        %v1066 = vadd.f32 %v967, %v1065
        %v1067 = vpop.f32.mrf.mxu0
        %1068 = vdwg.mxu0
        %v1069 = vtanh.pop %v1042
        %v1070 = vtanh.pop %v1048
        %v1071 = vtanh.pop %v1054
        %v1072 = vtanh.pop %v1060
        %v1073 = vtanh.pop %v1066
        %v1074 = vld [vmem:[%s4] sm:$0x1]
        %v1076 = vlaneseq
        %v1077 = vshrl.u32 %v1076, 7
        %v1078 = vsub.s32 0, %v1077
        %v1079 = vrot.slane %v1074, %v1078
        %v1081 = vmul.f32 %v1069, %v1079
        %v1082 = vmul.f32 %v1070, %v1079
        %v1083 = vmul.f32 %v1071, %v1079
        %v1084 = vmul.f32 %v1072, %v1079
        %v1085 = vmul.f32 %v1073, %v1079
        %v1086 = vsel %vm396, %v1081, 0.0
        %1087 = vadd.xlane.f32.xlu0 %v1086
        %v1088 = vpop.xlane.xlu0 %1087
        %v1089 = vsel %vm396, %v1082, 0.0
        %1090 = vadd.xlane.f32.xlu0 %v1089
        %v1091 = vpop.xlane.xlu0 %1090
        %v1092 = vsel %vm396, %v1083, 0.0
        %1093 = vadd.xlane.f32.xlu0 %v1092
        %v1094 = vpop.xlane.xlu0 %1093
        %v1095 = vsel %vm396, %v1084, 0.0
        %1096 = vadd.xlane.f32.xlu0 %v1095
        %v1097 = vpop.xlane.xlu0 %1096
        %v1098 = vsel %vm396, %v1085, 0.0
        %1099 = vadd.xlane.f32.xlu0 %v1098
        %v1100 = vpop.xlane.xlu0 %1099
        %s1101 = sld [smem:[#allocation2]]
        %v1102 = vstv %s1101
        %v1103 = vadd.f32 %v1088, %v1102
        %v1104 = vadd.f32 %v1091, %v1102
        %v1105 = vadd.f32 %v1094, %v1102
        %v1106 = vadd.f32 %v1097, %v1102
        %v1107 = vadd.f32 %v1100, %v1102
        %v1108 = vmax.f32 %v1103, %v1107
        %v1109 = vmax.f32 %v1108, %v1104
        %v1110 = vmax.f32 %v1105, %v1106
        %v1111 = vmax.f32 %v1109, %v1110
        %v1112 = vsub.f32 %v1103, %v1111
        %v1113 = vsub.f32 %v1104, %v1111
        %v1114 = vsub.f32 %v1105, %v1111
        %v1115 = vsub.f32 %v1106, %v1111
        %v1116 = vsub.f32 %v1107, %v1111
        %v1117 = vmul.f32 %v1112, 1.442695
        %v1118 = vpow.pop %v1117
        %v1119 = vmul.f32 %v1113, 1.442695
        %v1120 = vpow.pop %v1119
        %v1121 = vmul.f32 %v1114, 1.442695
        %v1122 = vpow.pop %v1121
        %v1123 = vmul.f32 %v1115, 1.442695
        %v1124 = vpow.pop %v1123
        %v1125 = vmul.f32 %v1116, 1.442695
        %v1126 = vpow.pop %v1125
        %v1127 = vadd.f32 %v1118, %v1120
        %v1128 = vadd.f32 %v1127, %v1122
        %v1129 = vadd.f32 %v1128, %v1124
        %v1130 = vadd.f32 %v1129, %v1126
        %v1131 = vmul.f32 %v1118, %v380
        %v1132 = vmul.f32 %v1120, %v381
        %v1133 = vmul.f32 %v1122, %v382
        %v1134 = vmul.f32 %v1124, %v383
        %v1135 = vmul.f32 %v1126, %v384
        %v1136 = vsel %vm396, %v1131, 0.0
        %v1137 = vsel %vm396, %v1132, 0.0
        %v1138 = vadd.f32 %v1136, %v1137
        %v1139 = vsel %vm396, %v1133, 0.0
        %v1140 = vadd.f32 %v1138, %v1139
        %v1141 = vsel %vm396, %v1134, 0.0
        %v1142 = vadd.f32 %v1140, %v1141
        %v1143 = vsel %vm396, %v1135, 0.0
        %v1144 = vadd.f32 %v1142, %v1143
        %v1145 = vrcp.pop %v1130
        %v1146 = vmul.f32 %v1144, %v1145
        %1147 = vst.msk [vmem:[%s322] sm:$0xff] %vm396, %v1146
        %s1148 = sand.u32 %s171, 1
        %s1149 = scalar_lea.sflag [#allocation5], %s1148
        %s1150 = sand.u32 %s171, 1
        %s1151 = smul.addr %s1150, 8
        %s1152 = scalar_lea.vmem [#allocation9], %s1151
        // Predicated region
        $region57: #{tpu_custom_call.1} parent=43 // pred_check
          %p1153 = pneg %p181
        $region58: #{tpu_custom_call.1} parent=43 // pred_check_branch
          %1155 = sbr.rel (%p1153) target = $region60
        $region59: #{tpu_custom_call.1} parent=43 // pred_region
          %s1157 = ssub.s32 128, 128
          %1158 = vsyncadd %s1149, %s1157
          %s1159 = smul.addr %s27, 128
          %s1160 = scalar_lea.hbm %s6, %s1159
          %s1162 = sshll.u32 %s1152, 4
          %s1163 = int_to_ptr.vmem [resolvable:$true] %s1162
          %1165 = dma.vmem_to_hbm [thread:$0]  %s1163, 128, %s1160, %s1149
        $region60: #{tpu_custom_call.1} parent=43 // pred_fallthru
          _
      $region44: #{tpu_custom_call.1} parent=5 // pred_fallthru
        _
      %p1166 = scmp.le.s32.totalorder 2, %s22
      // Predicated region
      $region61: #{tpu_custom_call.1} parent=5 // pred_check
        %p1167 = pneg %p1166
      $region62: #{tpu_custom_call.1} parent=5 // pred_check_branch
        %1169 = sbr.rel (%p1167) target = $region64
      $region63: #{tpu_custom_call.1} parent=5 // pred_region
        %s1170 = ssub.s32 %s22, 2
        // Predicated region
        $region65: #{tpu_custom_call.1} parent=63 // pred_check
          %p1171 = pneg %p187
        $region66: #{tpu_custom_call.1} parent=63 // pred_check_branch
          %1173 = sbr.rel (%p1171) target = $region68
        $region67: #{tpu_custom_call.1} parent=63 // pred_region
          %s1174 = sand.u32 %s172, 1
          %s1175 = scalar_lea.sflag [#allocation5], %s1174
          %s1176 = sand.u32 %s172, 1
          %s1177 = smul.addr %s1176, 8
          %s1178 = scalar_lea.vmem [#allocation9], %s1177
          %1179 = dma.done %s1175, 128
        $region68: #{tpu_custom_call.1} parent=63 // pred_fallthru
          _
      $region64: #{tpu_custom_call.1} parent=5 // pred_fallthru
        _
    $region6: #{tpu_custom_call.1} parent=1 // loop_footer
      %s26 = sadd.s32 1, %s22
    $region7: #{tpu_custom_call.1} parent=1 // loop_footer_branch
      %21 = sbr.rel target = $region3
    $region8: #{tpu_custom_call.1} parent=1 // loop_exit
      _
    %1180 = vsyncpa [#allocation4], 1
    %s1181 = scalar_lea.sflag [#allocation4], 1
    %1182 = vsyncpa %s1181, 1
    %1183 = vsyncpa [#allocation7], 1
    %s1184 = scalar_lea.sflag [#allocation7], 1
    %1185 = vsyncpa %s1184, 1
    %1186 = vsyncpa [#allocation5], 1
    %s1187 = scalar_lea.sflag [#allocation5], 1
    %1188 = vsyncpa %s1187, 1

</llo_original>
